<compile_context>
chip_gen: v7x
topology: tpu7x:2x2x1
jax: 0.10.0
libtpu: 0.0.40
codegen_flags: <defaults>
</compile_context>

<pallas_src>
import jax
import jax.numpy as jnp
from jax.experimental import pallas as pl
from jax.experimental.pallas import tpu as pltpu

_BLOCK_BYTES = 2 * 1024 * 1024   # ~2 MiB/block: measured ~85% of HBM roofline; 4x this
                                 # (in+out, double-buffered) fits every scoped-VMEM default.
_VMEM_LIMIT = 32 * 1024 * 1024   # explicit scoped-VMEM cap; <= physical VMEM on v5e/v6e/v7x.


def _mish_kernel(x_ref, o_ref):
    xf = x_ref[...].astype(jnp.float32)
    # tanh(softplus(x)) == (e^{2x} + 2 e^x) / (e^{2x} + 2 e^x + 2)  -> single exp.
    # Clamp at 20 (PyTorch softplus threshold) so exp never overflows; for x >= ~9 the
    # ratio is exactly 1.0f, so y == x without an explicit select.
    t = jnp.exp(jnp.minimum(xf, 20.0))
    num = t * (t + 2.0)
    y = xf * (num / (num + 2.0))
    o_ref[...] = y.astype(o_ref.dtype)


def _run(x, block_shape):
    """Run the kernel over `x`, blocking along axis 0 only."""
    grid0 = pl.cdiv(x.shape[0], block_shape[0])
    ndim = x.ndim
    index_map = lambda i: (i,) + (0,) * (ndim - 1)
    return pl.pallas_call(
        _mish_kernel,
        out_shape=jax.ShapeDtypeStruct(x.shape, x.dtype),
        grid=(grid0,),
        in_specs=[pl.BlockSpec(block_shape, index_map)],
        out_specs=pl.BlockSpec(block_shape, index_map),
        compiler_params=pltpu.CompilerParams(
            # "parallel" is load-bearing only on v7x (2 TCs); measured no-op on v5e/v6e.
            dimension_semantics=("parallel",),
            vmem_limit_bytes=_VMEM_LIMIT,
        ),
    )(x)


def _sublane_granule(itemsize):
    # Native packed sublane tile: 8 rows (4-byte), 16 (2-byte), 32 (1-byte).
    return 8 * max(1, 4 // itemsize)


def _pick_tile_rows(rows, lane, itemsize):
    g = _sublane_granule(itemsize)
    if rows <= g:
        return rows                                   # single full-extent block
    cap = max(g, (_BLOCK_BYTES // (lane * itemsize)) // g * g)   # byte-budgeted cap
    # Aim for >= 4 grid steps so each v7x TensorCore gets >= 2 blocks (keeps per-core
    # DMA/compute overlap); large tensors hit `cap` and get many steps anyway.
    want = -(-rows // 4)                              # cdiv(rows, 4)
    want = -(-want // g) * g                          # round up to sublane granule
    return min(cap, want)


@jax.jit
def mish(x):
    """Elementwise Mish matching x * tanh(F.softplus(x)) (softplus threshold=20)."""
    orig_shape = x.shape
    total = x.size
    itemsize = jnp.dtype(x.dtype).itemsize

    if total == 0:
        return x

    # Fast path: flat size divides a wide lane width -> reshape only (free), so the
    # only HBM traffic is the kernel's single read + write.
    for lane in (1024, 512, 256, 128):
        if total % lane == 0:
            rows = total // lane
            tr = _pick_tile_rows(rows, lane, itemsize)
            out = _run(x.reshape(rows, lane), (tr, lane))
            return out.reshape(orig_shape)

    # Unaligned flat size, rank >= 2: keep the trailing two dims as a full-extent
    # (always-legal) tile and block over the collapsed leading dims.  Still a single
    # HBM read + write -- no pad / slice copies.
    if x.ndim >= 2:
        r, c = orig_shape[-2], orig_shape[-1]
        # Conservative VMEM footprint of one (1, r, c) tile after (8, 128) layout padding.
        padded_tile = (-(-r // 8) * 8) * (-(-c // 128) * 128) * max(itemsize, 4)
        if padded_tile <= _BLOCK_BYTES:
            b = total // (r * c)
            lb = max(1, min(b, _BLOCK_BYTES // padded_tile))
            lb = min(lb, max(1, -(-b // 4)))          # >= 4 steps when cheap (v7x)
            out = _run(x.reshape(b, r, c), (lb, r, c))
            return out.reshape(orig_shape)

    # Last resort (rank < 2 odd sizes, or huge unaligned trailing dims): pad the flat
    # vector to an (8, 128) multiple.  Costs an extra HBM pass, but only tiny or
    # pathological shapes land here.
    # TODO(synk): a manual-DMA 1-D kernel would avoid the pad copy for huge unaligned
    # rank-1 inputs.
    lane = 128
    granule = 8 * lane
    padded = pl.cdiv(total, granule) * granule
    x_flat = jnp.pad(x.reshape(-1), (0, padded - total))
    rows = padded // lane
    tr = _pick_tile_rows(rows, lane, itemsize)
    out = _run(x_flat.reshape(rows, lane), (tr, lane))
    return out.reshape(-1)[:total].reshape(orig_shape)


def mish_ref(x):
    xf = x.astype(jnp.float32)
    sp = jnp.where(xf > 20.0, xf, jnp.log1p(jnp.exp(jnp.minimum(xf, 20.0))))
    return (xf * jnp.tanh(sp)).astype(x.dtype)


if __name__ == "__main__":
    key = jax.random.PRNGKey(0)

    # NCHW activation tensor (fast path: 2*4*16*16 = 2048 divides the lane width).
    x = jax.random.normal(key, (2, 4, 16, 16), dtype=jnp.float32) * 5.0
    y = mish(x)
    jax.block_until_ready(y)
    assert y.shape == x.shape and y.dtype == x.dtype
    assert jnp.allclose(y, mish_ref(x), atol=1e-5, rtol=1e-4), "mismatch (fast path)"

    # Larger aligned tensor to exercise the multi-step pipelined grid.
    x1 = jax.random.normal(jax.random.PRNGKey(2), (8, 64, 32, 32), dtype=jnp.float32) * 5.0
    y1 = mish(x1)
    jax.block_until_ready(y1)
    assert jnp.allclose(y1, mish_ref(x1), atol=1e-5, rtol=1e-4), "mismatch (multi-step path)"

    # Odd-sized tensor: exercises the zero-copy full-extent-trailing-tile remainder path.
    x2 = jax.random.normal(jax.random.PRNGKey(1), (3, 5, 7), dtype=jnp.float32) * 5.0
    y2 = mish(x2)
    jax.block_until_ready(y2)
    assert jnp.allclose(y2, mish_ref(x2), atol=1e-5, rtol=1e-4), "mismatch (remainder path)"

    print("KERNEL_OK")
</pallas_src>

<mosaic_0001>
module attributes {stable_mosaic.version = 11 : i64} {
  func.func @_mish_kernel(%arg0: i32, %arg1: memref<2x1024xf32, #tpu.memory_space<vmem>>, %arg2: memref<2x1024xf32, #tpu.memory_space<vmem>>) attributes {dimension_semantics = [#tpu.dimension_semantics<parallel>], iteration_bounds = array<i64: 1>, scalar_prefetch = 0 : i64, scratch_operands = 0 : i64, tpu.core_type = #tpu.core_type<tc>, window_params = [{transform_indices = @transform_0, window_bounds = array<i64: 2, 1024>}, {transform_indices = @transform_1, window_bounds = array<i64: 2, 1024>}]} {
    %c0 = arith.constant 0 : index
    %c0_0 = arith.constant 0 : index
    %0 = vector.load %arg1[%c0, %c0_0] : memref<2x1024xf32, #tpu.memory_space<vmem>>, vector<2x1024xf32>
    %cst = arith.constant 2.000000e+01 : f32
    %1 = vector.broadcast %cst : f32 to vector<2x1024xf32>
    %2 = arith.minimumf %0, %1 : vector<2x1024xf32>
    %3 = math.exp %2 : vector<2x1024xf32>
    %cst_1 = arith.constant 2.000000e+00 : f32
    %4 = vector.broadcast %cst_1 : f32 to vector<2x1024xf32>
    %5 = arith.addf %3, %4 : vector<2x1024xf32>
    %6 = arith.mulf %3, %5 : vector<2x1024xf32>
    %cst_2 = arith.constant 2.000000e+00 : f32
    %7 = vector.broadcast %cst_2 : f32 to vector<2x1024xf32>
    %8 = arith.addf %6, %7 : vector<2x1024xf32>
    %9 = arith.divf %6, %8 : vector<2x1024xf32>
    %10 = arith.mulf %0, %9 : vector<2x1024xf32>
    %c0_3 = arith.constant 0 : index
    %c0_4 = arith.constant 0 : index
    %11 = vector.load %arg2[%c0_3, %c0_4] : memref<2x1024xf32, #tpu.memory_space<vmem>>, vector<2x1024xf32>
    tpu.vector_store %arg2[%c0_3, %c0_4], %10 {strides = array<i32>} : memref<2x1024xf32, #tpu.memory_space<vmem>>, vector<2x1024xf32>,
    return
  }
  func.func @transform_0(%arg0: i32) -> (i32, i32) {
    %c0_i32 = arith.constant 0 : i32
    %c0_i32_0 = arith.constant 0 : i32
    return %arg0, %c0_i32 : i32, i32
  }
  func.func @transform_1(%arg0: i32) -> (i32, i32) {
    %c0_i32 = arith.constant 0 : i32
    %c0_i32_0 = arith.constant 0 : i32
    return %arg0, %c0_i32 : i32, i32
  }
}

</mosaic_0001>

<llo_original>
// kernel: mish.1
$region0: #{mish.1}
  #allocation0 [shape = 'u32[]', space=smem, size = 0x4, offset = 0x4, fixed_abs, tag = 'smem constant byte address 0x4 - core index']
  #allocation1 [shape = 'u32[144,128]{1,0:T(1,128)}', space=vmem, size = 0x12000, scoped, tag = 'internal scratch']
  %s0 = inlined_call_operand.vmem [shape: f32[2,1024], index: 0, kind: input, shape index: {}]
  %s1 = inlined_call_operand.vmem [shape: f32[2,1024], index: 1, kind: output, shape index: {}]
  %s2 = sld [smem:[#allocation0]]
  $region14: #{mish.1} parent=0
    _
  %s4 = ssub.s32 1, %s2
  %s5 = scalar_select 0, %s4, %s2
  // Predicated region
  $region2: #{mish.1} parent=0 // pred_check
    _
  $region3: #{mish.1} parent=0 // pred_check_branch
    %7 = sbr.rel (0) target = $region5
  $region4: #{mish.1} parent=0 // pred_region
    _
  $region5: #{mish.1} parent=0 // pred_fallthru
    _
  %v8 = vld [vmem:[%s0] sm:$0xff]
  %v9 = vld [vmem:[%s0 + $0x8] sm:$0xff]
  %v10 = vmin.f32 %v8, 20.0
  %v11 = vmin.f32 %v9, 20.0
  %v12 = vmul.f32 %v10, 1.442695
  %v13 = vpow.pop %v12
  %v14 = vmul.f32 %v11, 1.442695
  %v15 = vpow.pop %v14
  %v16 = vadd.f32 %v13, 2.0
  %v17 = vadd.f32 %v15, 2.0
  %v18 = vmul.f32 %v13, %v16
  %v19 = vmul.f32 %v15, %v17
  %v20 = vadd.f32 %v18, 2.0
  %v21 = vadd.f32 %v19, 2.0
  %v22 = vrcp.pop %v20
  %v23 = vmul.f32 %v18, %v22
  %v24 = vrcp.pop %v21
  %v25 = vmul.f32 %v19, %v24
  %v26 = vmul.f32 %v8, %v23
  %v27 = vmul.f32 %v9, %v25
  %28 = vst [vmem:[%s1] sm:$0xff] %v26
  %29 = vst [vmem:[%s1 + $0x8] sm:$0xff] %v27
  // Predicated region
  $region6: #{mish.1} parent=0 // pred_check
    _
  $region7: #{mish.1} parent=0 // pred_check_branch
    %31 = sbr.rel (0) target = $region9
  $region8: #{mish.1} parent=0 // pred_region
    _
  $region9: #{mish.1} parent=0 // pred_fallthru
    _
  // Predicated region
  $region10: #{mish.1} parent=0 // pred_check
    _
  $region11: #{mish.1} parent=0 // pred_check_branch
    %33 = sbr.rel (0) target = $region13
  $region12: #{mish.1} parent=0 // pred_region
    _
  $region13: #{mish.1} parent=0 // pred_fallthru
    _

</llo_original>
